<compile_context>
chip_gen: v6e
topology: v6e:2x2x1
jax: 0.10.0
libtpu: 0.0.40
codegen_flags: <defaults>
</compile_context>

<pallas_src>
import functools

import jax
import jax.numpy as jnp
from jax.experimental import pallas as pl
from jax.experimental.pallas import tpu as pltpu


def _round_up(x, m):
    return ((x + m - 1) // m) * m


def _pick_row_tile(b_pad, tq_max):
    """Largest multiple of 64 dividing b_pad, <= tq_max, leaving >= 2 row
    blocks so the 'parallel' grid axis feeds both v7x TensorCores."""
    upper = min(tq_max, max(b_pad // 2, 64))
    best, cand = 64, 128
    while cand <= upper:
        if b_pad % cand == 0:
            best = cand
        cand += 64
    return best


# ---------------------------------------------------------------------------
# SupConLoss: tiled online-softmax (flash-style) kernel
# ---------------------------------------------------------------------------
def _supcon_kernel(lab_r_ref, lab_c_ref, npos_ref, anc_ref, con_ref,
                   loss_ref, valid_ref,
                   m_sc, l_sc, pos_sc,
                   *, batch, temperature, scale_by_temperature, tq, tk):
    i = pl.program_id(0)          # anchor-row block ("parallel")
    j = pl.program_id(1)          # contrast-col block (reduction, "arbitrary")

    @pl.when(j == 0)
    def _init():
        m_sc[...] = jnp.full_like(m_sc, -jnp.inf)
        l_sc[...] = jnp.zeros_like(l_sc)
        pos_sc[...] = jnp.zeros_like(pos_sc)

    # (tq, tk) similarity tile on the MXU.  Anchors already carry the
    # 1/temperature scale and both operands were L2-normalized in the wrapper,
    # so there is no per-tile normalization or scaling work.
    s = jax.lax.dot_general(
        anc_ref[...], con_ref[...], (((1,), (0,)), ((), ())),
        preferred_element_type=jnp.float32)

    # Cheap masks: only (1,tk)/(tq,1) iotas, broadcast compares on the VPU.
    col_ids = j * tk + jax.lax.broadcasted_iota(jnp.int32, (1, tk), 1)
    row_ids = i * tq + jax.lax.broadcasted_iota(jnp.int32, (tq, 1), 0)
    valid = jnp.logical_and(col_ids < batch, row_ids != col_ids)   # (tq, tk)
    pos = jnp.logical_and(valid, lab_r_ref[...] == lab_c_ref[...])

    # Online log-sum-exp over non-diagonal in-batch columns (exact; taking the
    # max over the whole tile, diag/pad included, is still a valid stabilizer).
    m_prev = m_sc[...]
    m_new = jnp.maximum(m_prev, jnp.max(s, axis=1, keepdims=True))
    e = jnp.where(valid, jnp.exp(s - m_new), 0.0)
    l_sc[...] = l_sc[...] * jnp.exp(m_prev - m_new) + jnp.sum(
        e, axis=1, keepdims=True)
    pos_sc[...] = pos_sc[...] + jnp.sum(
        jnp.where(pos, s, 0.0), axis=1, keepdims=True)
    m_sc[...] = m_new

    @pl.when(j == pl.num_programs(1) - 1)
    def _finalize():
        lse = m_sc[...] + jnp.log(l_sc[...])          # logsumexp over j != i
        npos = npos_ref[...]                          # precomputed, label-only
        ok = npos > 0.0
        inv = pl.reciprocal(jnp.where(ok, npos, 1.0), approx=False)
        # sum_j pos*(s - lse) == sum_j pos*s - npos*lse
        mean_logp = (pos_sc[...] - npos * lse) * inv
        per_row = jnp.where(ok, -mean_logp, 0.0)
        if scale_by_temperature:
            per_row = per_row * temperature
        loss_ref[...] = per_row
        valid_ref[...] = ok.astype(jnp.float32)
        # TODO(synk): PyTorch raises ValueError when log_probs has NaN; a
        # data-dependent host-side raise has no Pallas equivalent.


def supcon_loss(features, labels, temperature=0.5, scale_by_temperature=True,
                sim_dtype=jnp.bfloat16, row_block=512):
    """Pallas TPU SupConLoss.  features: (B, D) float, labels: (B,) int."""
    B, D = features.shape
    f = features.astype(jnp.float32)
    # F.normalize(p=2, dim=1) with PyTorch's 1e-12 clamp, done ONCE here.
    f = f / jnp.maximum(jnp.sqrt(jnp.sum(f * f, axis=1, keepdims=True)), 1e-12)

    b_pad = _round_up(B, 128)
    tk = 128
    itemsize = jnp.dtype(sim_dtype).itemsize
    # Keep the double-buffered (tq, D) anchor block well under v7x's 32 MiB
    # scoped VMEM default.
    vmem_cap = max(64, ((8 * 1024 * 1024) // max(D * itemsize, 1)) // 64 * 64)
    tq = _pick_row_tile(b_pad, min(row_block, vmem_cap))

    inv_t = 1.0 / float(temperature)
    anchors = jnp.pad((f * inv_t).astype(sim_dtype), ((0, b_pad - B), (0, 0)))
    contrast = jnp.pad(f.T.astype(sim_dtype), ((0, 0), (0, b_pad - B)))

    labs = labels.reshape(-1).astype(jnp.int32)
    lab_pad = jnp.pad(labs, (0, b_pad - B), constant_values=-1)
    lab_rows = lab_pad.reshape(b_pad, 1)
    lab_cols = lab_pad.reshape(1, b_pad)
    # Per-row positive counts depend only on labels: compute once here (XLA
    # fuses the compare+reduce; nothing B^2 is shipped to the kernel).
    npos = jnp.sum((labs[:, None] == labs[None, :]).astype(jnp.float32),
                   axis=1) - 1.0
    npos = jnp.pad(npos, (0, b_pad - B)).reshape(b_pad, 1)

    kernel = functools.partial(
        _supcon_kernel, batch=B, temperature=float(temperature),
        scale_by_temperature=bool(scale_by_temperature), tq=tq, tk=tk)

    loss_rows, valid_rows = pl.pallas_call(
        kernel,
        out_shape=(jax.ShapeDtypeStruct((b_pad, 1), jnp.float32),
                   jax.ShapeDtypeStruct((b_pad, 1), jnp.float32)),
        grid_spec=pltpu.PrefetchScalarGridSpec(
            num_scalar_prefetch=0,
            grid=(b_pad // tq, b_pad // tk),
            in_specs=[
                pl.BlockSpec((tq, 1), lambda i, j: (i, 0)),    # row labels
                pl.BlockSpec((1, tk), lambda i, j: (0, j)),    # col labels
                pl.BlockSpec((tq, 1), lambda i, j: (i, 0)),    # per-row #pos
                pl.BlockSpec((tq, D), lambda i, j: (i, 0)),    # anchors
                pl.BlockSpec((D, tk), lambda i, j: (0, j)),    # contrast (K-major)
            ],
            out_specs=[
                pl.BlockSpec((tq, 1), lambda i, j: (i, 0)),
                pl.BlockSpec((tq, 1), lambda i, j: (i, 0)),
            ],
            scratch_shapes=[pltpu.VMEM((tq, 1), jnp.float32)] * 3,
        ),
        compiler_params=pltpu.CompilerParams(
            dimension_semantics=("parallel", "arbitrary"),
            vmem_limit_bytes=32 * 1024 * 1024),
    )(lab_rows, lab_cols, npos, anchors, contrast)

    # Tiny epilogue: mean over rows with at least one positive.
    return jnp.sum(loss_rows) / jnp.sum(valid_rows)


# ---------------------------------------------------------------------------
# FocalLoss kernel
# ---------------------------------------------------------------------------
def _focal_kernel(logit_ref, lab_ref, alpha_ref, loss_ref,
                  *, n_rows, gamma, tb):
    x = logit_ref[...].astype(jnp.float32)                 # (tb, C)
    lab = lab_ref[...]                                     # (tb, 1) int32
    col = jax.lax.broadcasted_iota(jnp.int32, x.shape, 1)
    onehot = jnp.where(col == lab, 1.0, 0.0)

    # log-softmax over classes (lanes), gather via one-hot (no real gather).
    m = jnp.max(x, axis=1, keepdims=True)
    lse = m + jnp.log(jnp.sum(jnp.exp(x - m), axis=1, keepdims=True))
    logpt = jnp.sum(x * onehot, axis=1, keepdims=True) - lse   # (tb, 1)
    pt = jnp.exp(logpt)                                        # before alpha
    at = jnp.sum(onehot * alpha_ref[...], axis=1, keepdims=True)
    logpt = logpt * at

    g = float(gamma)
    if g == int(g) and g >= 0:        # integer gamma -> repeated multiply
        w = jnp.ones_like(pt)
        for _ in range(int(g)):
            w = w * (1.0 - pt)
    else:                             # general gamma via exp/log
        w = jnp.exp(g * jnp.log(jnp.maximum(1.0 - pt, 1e-30)))
    loss = -w * logpt

    rows = pl.program_id(0) * tb + jax.lax.broadcasted_iota(
        jnp.int32, (tb, 1), 0)
    loss_ref[...] = jnp.where(rows < n_rows, loss, 0.0)


def _alpha_vector(alpha, num_classes):
    if alpha is None:
        return jnp.ones((1, num_classes), jnp.float32)
    if isinstance(alpha, (float, int)):
        vec = jnp.array([float(alpha), 1.0 - float(alpha)], jnp.float32)
    else:
        vec = jnp.asarray(alpha, jnp.float32).reshape(-1)
    if vec.shape[0] < num_classes:
        vec = jnp.pad(vec, (0, num_classes - vec.shape[0]))
    return vec[:num_classes].reshape(1, num_classes)


def focal_loss(inputs, targets, gamma=2, alpha=None, size_average=True,
               block_size=2048):
    x = inputs
    if x.ndim > 2:   # (N, C, *spatial) -> (N*spatial, C), like the PyTorch view
        n, c = x.shape[0], x.shape[1]
        x = x.reshape(n, c, -1).transpose(0, 2, 1).reshape(-1, c)
    x = x.astype(jnp.float32)
    t = targets.reshape(-1).astype(jnp.int32)
    N, C = x.shape

    # Large row blocks amortize per-grid-step overhead; cap so the
    # double-buffered (tb, C) input stays comfortably inside v7x VMEM.
    tb_cap = max(8, (((4 * 1024 * 1024) // max(C, 1)) // 8) * 8)
    tb = min(block_size, tb_cap, _round_up(N, 8))
    n_pad = _round_up(N, tb)
    x = jnp.pad(x, ((0, n_pad - N), (0, 0)))
    t = jnp.pad(t, (0, n_pad - N)).reshape(n_pad, 1)
    alpha_vec = _alpha_vector(alpha, C)

    kernel = functools.partial(_focal_kernel, n_rows=N, gamma=gamma, tb=tb)
    per_row = pl.pallas_call(
        kernel,
        out_shape=jax.ShapeDtypeStruct((n_pad, 1), jnp.float32),
        grid_spec=pltpu.PrefetchScalarGridSpec(
            num_scalar_prefetch=0,
            grid=(n_pad // tb,),
            in_specs=[
                pl.BlockSpec((tb, C), lambda i: (i, 0)),
                pl.BlockSpec((tb, 1), lambda i: (i, 0)),
                pl.BlockSpec((1, C), lambda i: (0, 0)),
            ],
            out_specs=pl.BlockSpec((tb, 1), lambda i: (i, 0)),
        ),
        compiler_params=pltpu.CompilerParams(
            dimension_semantics=("parallel",),
            vmem_limit_bytes=32 * 1024 * 1024),
    )(x, t, alpha_vec)

    total = jnp.sum(per_row)
    return total / N if size_average else total


# ---------------------------------------------------------------------------
# FocalSupConLoss = FocalLoss(input, labels) + SupConLoss(features, labels)
# ---------------------------------------------------------------------------
def focal_supcon_loss(inputs, features, labels, temperature=0.5,
                      scale_by_temperature=True, gamma=2, alpha=None,
                      size_average=True, sim_dtype=jnp.bfloat16):
    loss_focal = focal_loss(inputs, labels, gamma=gamma, alpha=alpha,
                            size_average=size_average)
    loss_con = supcon_loss(features, labels, temperature=temperature,
                           scale_by_temperature=scale_by_temperature,
                           sim_dtype=sim_dtype)
    return loss_focal + loss_con


# ---------------------------------------------------------------------------
# Pure-JAX references (mirror the PyTorch forward)
# ---------------------------------------------------------------------------
def _focal_loss_ref(inputs, targets, gamma=2, alpha=None, size_average=True):
    x = inputs
    if x.ndim > 2:
        n, c = x.shape[0], x.shape[1]
        x = x.reshape(n, c, -1).transpose(0, 2, 1).reshape(-1, c)
    x = x.astype(jnp.float32)
    t = targets.reshape(-1).astype(jnp.int32)
    logp = jax.nn.log_softmax(x, axis=1)
    logpt = jnp.take_along_axis(logp, t[:, None], axis=1)[:, 0]
    pt = jnp.exp(logpt)
    if alpha is not None:
        if isinstance(alpha, (float, int)):
            avec = jnp.array([float(alpha), 1.0 - float(alpha)], jnp.float32)
        else:
            avec = jnp.asarray(alpha, jnp.float32)
        logpt = logpt * avec[t]
    loss = -((1.0 - pt) ** gamma) * logpt
    return loss.mean() if size_average else loss.sum()


def _supcon_loss_ref(features, labels, temperature=0.5,
                     scale_by_temperature=True):
    f = features.astype(jnp.float32)
    f = f / jnp.maximum(jnp.linalg.norm(f, axis=1, keepdims=True), 1e-12)
    B = f.shape[0]
    lab = labels.reshape(-1, 1)
    mask = (lab == lab.T).astype(jnp.float32)
    sim = jnp.matmul(f, f.T, precision=jax.lax.Precision.HIGHEST) / temperature
    logits = sim - jnp.max(sim, axis=1, keepdims=True)
    exp_logits = jnp.exp(logits)
    logits_mask = 1.0 - jnp.eye(B, dtype=jnp.float32)
    pos = mask * logits_mask
    neg = 1.0 - mask
    denom = (jnp.sum(exp_logits * neg, axis=1, keepdims=True)
             + jnp.sum(exp_logits * pos, axis=1, keepdims=True))
    log_probs = logits - jnp.log(denom)
    num_pos = jnp.sum(pos, axis=1)
    pos_logsum = jnp.sum(log_probs * pos, axis=1)
    valid = num_pos > 0
    per_row = jnp.where(valid, pos_logsum / jnp.where(valid, num_pos, 1.0), 0.0)
    loss_rows = -per_row
    if scale_by_temperature:
        loss_rows = loss_rows * temperature
    return jnp.sum(loss_rows) / jnp.sum(valid.astype(jnp.float32))


def _focal_supcon_ref(inputs, features, labels, temperature=0.5,
                      scale_by_temperature=True, gamma=2, alpha=None,
                      size_average=True):
    return (_focal_loss_ref(inputs, labels, gamma, alpha, size_average)
            + _supcon_loss_ref(features, labels, temperature,
                               scale_by_temperature))


if __name__ == "__main__":
    key = jax.random.PRNGKey(0)
    k1, k2, k3 = jax.random.split(key, 3)
    B, C, D = 8, 4, 32
    logits = jax.random.normal(k1, (B, C), dtype=jnp.float32)
    features = jax.random.normal(k2, (B, D), dtype=jnp.float32)
    labels = jax.random.randint(k3, (B,), 0, C, dtype=jnp.int32)

    ref = _focal_supcon_ref(logits, features, labels, temperature=0.5,
                            scale_by_temperature=True, gamma=2, alpha=None,
                            size_average=True)

    # Exact-path check (f32 similarity matmul) against the reference.
    loss_f32 = focal_supcon_loss(logits, features, labels, temperature=0.5,
                                 scale_by_temperature=True, gamma=2,
                                 alpha=None, size_average=True,
                                 sim_dtype=jnp.float32)
    loss_f32 = jax.block_until_ready(loss_f32)
    assert jnp.allclose(loss_f32, ref, rtol=1e-4, atol=1e-4), (loss_f32, ref)

    # Default fast path (bf16 MXU similarity) — small expected deviation.
    loss_bf16 = focal_supcon_loss(logits, features, labels, temperature=0.5,
                                  scale_by_temperature=True, gamma=2,
                                  alpha=None, size_average=True)
    loss_bf16 = jax.block_until_ready(loss_bf16)
    assert jnp.allclose(loss_bf16, ref, rtol=1e-2, atol=1e-2), (loss_bf16, ref)

    print("KERNEL_OK")
</pallas_src>

<mosaic_0001>
module attributes {stable_mosaic.version = 11 : i64} {
  func.func @_focal_kernel(%arg0: i32, %arg1: memref<8x4xf32, #tpu.memory_space<vmem>>, %arg2: memref<8x1xi32, #tpu.memory_space<vmem>>, %arg3: memref<1x4xf32, #tpu.memory_space<vmem>>, %arg4: memref<8x1xf32, #tpu.memory_space<vmem>>) attributes {dimension_semantics = [#tpu.dimension_semantics<parallel>], iteration_bounds = array<i64: 1>, scalar_prefetch = 0 : i64, scratch_operands = 0 : i64, tpu.core_type = #tpu.core_type<tc>, window_params = [{transform_indices = @transform_0, window_bounds = array<i64: 8, 4>}, {transform_indices = @transform_1, window_bounds = array<i64: 8, 1>}, {pipeline_mode = #tpu.pipeline_mode<synchronous>, transform_indices = @transform_2, window_bounds = array<i64: 1, 4>}, {transform_indices = @transform_3, window_bounds = array<i64: 8, 1>}]} {
    %c0 = arith.constant 0 : index
    %c0_0 = arith.constant 0 : index
    %0 = vector.load %arg1[%c0, %c0_0] : memref<8x4xf32, #tpu.memory_space<vmem>>, vector<8x4xf32>
    %c0_1 = arith.constant 0 : index
    %c0_2 = arith.constant 0 : index
    %1 = vector.load %arg2[%c0_1, %c0_2] : memref<8x1xi32, #tpu.memory_space<vmem>>, vector<8x1xi32>
    %2 = tpu.iota {dimensions = array<i32: 1>} : vector<8x4xi32>
    %3 = vector.broadcast %1 : vector<8x1xi32> to vector<8x4xi32>
    %4 = arith.cmpi eq, %2, %3 : vector<8x4xi32>
    %cst = arith.constant 1.000000e+00 : f32
    %cst_3 = arith.constant 0.000000e+00 : f32
    %5 = vector.broadcast %cst : f32 to vector<8x4xf32>
    %6 = vector.broadcast %cst_3 : f32 to vector<8x4xf32>
    %7 = arith.select %4, %5, %6 : vector<8x4xi1>, vector<8x4xf32>
    %cst_4 = arith.constant dense<0xFF800000> : vector<8xf32>
    %8 = vector.multi_reduction <maximumf>, %0, %cst_4 [1] : vector<8x4xf32> to vector<8xf32>
    %9 = vector.shape_cast %8 : vector<8xf32> to vector<8x1xf32>
    %10 = vector.broadcast %9 : vector<8x1xf32> to vector<8x4xf32>
    %11 = arith.subf %0, %10 : vector<8x4xf32>
    %12 = math.exp %11 : vector<8x4xf32>
    %cst_5 = arith.constant dense<0.000000e+00> : vector<8xf32>
    %13 = vector.multi_reduction <add>, %12, %cst_5 [1] : vector<8x4xf32> to vector<8xf32>
    %14 = vector.shape_cast %13 : vector<8xf32> to vector<8x1xf32>
    %15 = math.log %14 : vector<8x1xf32>
    %16 = arith.addf %9, %15 : vector<8x1xf32>
    %17 = arith.mulf %0, %7 : vector<8x4xf32>
    %cst_6 = arith.constant dense<0.000000e+00> : vector<8xf32>
    %18 = vector.multi_reduction <add>, %17, %cst_6 [1] : vector<8x4xf32> to vector<8xf32>
    %19 = vector.shape_cast %18 : vector<8xf32> to vector<8x1xf32>
    %20 = arith.subf %19, %16 : vector<8x1xf32>
    %21 = math.exp %20 : vector<8x1xf32>
    %c0_7 = arith.constant 0 : index
    %c0_8 = arith.constant 0 : index
    %22 = vector.load %arg3[%c0_7, %c0_8] : memref<1x4xf32, #tpu.memory_space<vmem>>, vector<1x4xf32>
    %23 = vector.broadcast %22 : vector<1x4xf32> to vector<8x4xf32>
    %24 = arith.mulf %7, %23 : vector<8x4xf32>
    %cst_9 = arith.constant dense<0.000000e+00> : vector<8xf32>
    %25 = vector.multi_reduction <add>, %24, %cst_9 [1] : vector<8x4xf32> to vector<8xf32>
    %26 = vector.shape_cast %25 : vector<8xf32> to vector<8x1xf32>
    %27 = arith.mulf %20, %26 : vector<8x1xf32>
    %cst_10 = arith.constant 1.000000e+00 : f32
    %28 = vector.broadcast %cst_10 : f32 to vector<8x1xf32>
    %cst_11 = arith.constant 1.000000e+00 : f32
    %29 = vector.broadcast %cst_11 : f32 to vector<8x1xf32>
    %30 = arith.subf %29, %21 : vector<8x1xf32>
    %31 = arith.mulf %28, %30 : vector<8x1xf32>
    %cst_12 = arith.constant 1.000000e+00 : f32
    %32 = vector.broadcast %cst_12 : f32 to vector<8x1xf32>
    %33 = arith.subf %32, %21 : vector<8x1xf32>
    %34 = arith.mulf %31, %33 : vector<8x1xf32>
    %cst_13 = arith.constant 0.000000e+00 : f32
    %35 = vector.broadcast %cst_13 : f32 to vector<8x1xf32>
    %36 = arith.subf %35, %34 : vector<8x1xf32>
    %37 = arith.mulf %36, %27 : vector<8x1xf32>
    %c8_i32 = arith.constant 8 : i32
    %38 = arith.muli %arg0, %c8_i32 : i32
    %39 = tpu.iota {dimensions = array<i32: 0>} : vector<8x1xi32>
    %40 = vector.broadcast %38 : i32 to vector<8x1xi32>
    %41 = arith.addi %40, %39 : vector<8x1xi32>
    %c8_i32_14 = arith.constant 8 : i32
    %42 = vector.broadcast %c8_i32_14 : i32 to vector<8x1xi32>
    %43 = arith.cmpi slt, %41, %42 : vector<8x1xi32>
    %cst_15 = arith.constant 0.000000e+00 : f32
    %44 = vector.broadcast %cst_15 : f32 to vector<8x1xf32>
    %45 = arith.select %43, %37, %44 : vector<8x1xi1>, vector<8x1xf32>
    %c0_16 = arith.constant 0 : index
    %c0_17 = arith.constant 0 : index
    %46 = vector.load %arg4[%c0_16, %c0_17] : memref<8x1xf32, #tpu.memory_space<vmem>>, vector<8x1xf32>
    tpu.vector_store %arg4[%c0_16, %c0_17], %45 {strides = array<i32>} : memref<8x1xf32, #tpu.memory_space<vmem>>, vector<8x1xf32>,
    return
  }
  func.func @transform_0(%arg0: i32) -> (i32, i32) {
    %c0_i32 = arith.constant 0 : i32
    %c0_i32_0 = arith.constant 0 : i32
    return %arg0, %c0_i32 : i32, i32
  }
  func.func @transform_1(%arg0: i32) -> (i32, i32) {
    %c0_i32 = arith.constant 0 : i32
    %c0_i32_0 = arith.constant 0 : i32
    return %arg0, %c0_i32 : i32, i32
  }
  func.func @transform_2(%arg0: i32) -> (i32, i32) {
    %c0_i32 = arith.constant 0 : i32
    %c0_i32_0 = arith.constant 0 : i32
    %c0_i32_1 = arith.constant 0 : i32
    return %c0_i32, %c0_i32_0 : i32, i32
  }
  func.func @transform_3(%arg0: i32) -> (i32, i32) {
    %c0_i32 = arith.constant 0 : i32
    %c0_i32_0 = arith.constant 0 : i32
    return %arg0, %c0_i32 : i32, i32
  }
}

</mosaic_0001>

<llo_original>
// kernel: tpu_custom_call.1
$region0: #{tpu_custom_call.1}
  #allocation0 [shape = 'u32[]', space=smem, size = 0x4, offset = 0x4, fixed_abs, tag = 'smem constant byte address 0x4 - core index']
  #allocation1 [shape = 'u32[144,128]{1,0:T(1,128)}', space=vmem, size = 0x12000, scoped, tag = 'internal scratch']
  %s0 = inlined_call_operand.vmem [shape: f32[8,4], index: 0, kind: input, shape index: {}]
  %s1 = inlined_call_operand.vmem [shape: s32[8,1], index: 1, kind: input, shape index: {}]
  %s2 = inlined_call_operand.vmem [shape: f32[1,4], index: 2, kind: input, shape index: {}]
  %s3 = inlined_call_operand.vmem [shape: f32[8,1], index: 3, kind: output, shape index: {}]
  %s4 = sld [smem:[#allocation0]]
  $region22: #{tpu_custom_call.1} parent=0
    _
  %s6 = ssub.s32 1, %s4
  %s7 = scalar_select 0, %s6, %s4
  // Predicated region
  $region2: #{tpu_custom_call.1} parent=0 // pred_check
    _
  $region3: #{tpu_custom_call.1} parent=0 // pred_check_branch
    %9 = sbr.rel (0) target = $region5
  $region4: #{tpu_custom_call.1} parent=0 // pred_region
    _
  $region5: #{tpu_custom_call.1} parent=0 // pred_fallthru
    _
  // Predicated region
  $region6: #{tpu_custom_call.1} parent=0 // pred_check
    _
  $region7: #{tpu_custom_call.1} parent=0 // pred_check_branch
    %11 = sbr.rel (0) target = $region9
  $region8: #{tpu_custom_call.1} parent=0 // pred_region
    _
  $region9: #{tpu_custom_call.1} parent=0 // pred_fallthru
    _
  // Predicated region
  $region10: #{tpu_custom_call.1} parent=0 // pred_check
    _
  $region11: #{tpu_custom_call.1} parent=0 // pred_check_branch
    %13 = sbr.rel (0) target = $region13
  $region12: #{tpu_custom_call.1} parent=0 // pred_region
    _
  $region13: #{tpu_custom_call.1} parent=0 // pred_fallthru
    _
  %v14 = vld [vmem:[%s0] sm:$0xff]
  %v15 = vld [vmem:[%s1] sm:$0xff]
  %v16 = vlaneseq
  %v17 = vand.u32 %v16, 127
  %18 = vset.pattern.permute.xlu0 0
  %19 = vperm.xlu0 %18, %v15
  %v20 = vpop.permute.xlu0 %19
  %vm21 = vcmp.eq.s32.totalorder %v17, %v20
  %v22 = vsel %vm21, 1.0, 0.0
  %vm23 = vcmask 31744
  %v24 = vsel %vm23, %v14, -inf
  %25 = vmax.xlane.f32.xlu0 %v24
  %v26 = vpop.xlane.xlu0 %25
  %v27 = vsub.f32 %v14, %v26
  %v28 = vmul.f32 %v27, 1.442695
  %v29 = vpow.pop %v28
  %v30 = vsel %vm23, %v29, 0.0
  %31 = vadd.xlane.f32.xlu0 %v30
  %v32 = vpop.xlane.xlu0 %31
  %v33 = vlog2.pop %v32
  %v34 = vmul.f32 %v33, 0.6931472
  %v35 = vadd.f32 %v26, %v34
  %v36 = vmul.f32 %v14, %v22
  %v37 = vsel %vm23, %v36, 0.0
  %38 = vadd.xlane.f32.xlu0 %v37
  %v39 = vpop.xlane.xlu0 %38
  %v40 = vsub.f32 %v39, %v35
  %v41 = vmul.f32 %v40, 1.442695
  %v42 = vpow.pop %v41
  %v43 = vld [vmem:[%s2] sm:$0x1]
  %v45 = vlaneseq
  %v46 = vshrl.u32 %v45, 7
  %v47 = vsub.s32 0, %v46
  %v48 = vrot.slane %v43, %v47
  %v50 = vmul.f32 %v22, %v48
  %v51 = vsel %vm23, %v50, 0.0
  %52 = vadd.xlane.f32.xlu0 %v51
  %v53 = vpop.xlane.xlu0 %52
  %v54 = vmul.f32 %v40, %v53
  %v55 = vsub.f32 1.0, %v42
  %v56 = vmul.f32 %v55, %v55
  %v57 = vsub.f32 0.0, %v56
  %v58 = vmul.f32 %v57, %v54
  %s59 = smul.u32 0, 8
  %v60 = vlaneseq
  %v61 = vshrl.u32 %v60, 7
  %v62 = vstv %s59
  %v63 = vadd.s32 %v62, %v61
  %vm64 = vcmp.lt.s32.totalorder %v63, 8
  %v65 = vsel %vm64, %v58, 0.0
  %vm66 = vcmask 7168
  %67 = vst.msk [vmem:[%s3] sm:$0xff] %vm66, %v65
  // Predicated region
  $region14: #{tpu_custom_call.1} parent=0 // pred_check
    _
  $region15: #{tpu_custom_call.1} parent=0 // pred_check_branch
    %69 = sbr.rel (0) target = $region17
  $region16: #{tpu_custom_call.1} parent=0 // pred_region
    _
  $region17: #{tpu_custom_call.1} parent=0 // pred_fallthru
    _
  // Predicated region
  $region18: #{tpu_custom_call.1} parent=0 // pred_check
    _
  $region19: #{tpu_custom_call.1} parent=0 // pred_check_branch
    %71 = sbr.rel (0) target = $region21
  $region20: #{tpu_custom_call.1} parent=0 // pred_region
    _
  $region21: #{tpu_custom_call.1} parent=0 // pred_fallthru
    _

</llo_original>
